<compile_context>
chip_gen: v7x
topology: tpu7x:2x2x1
jax: 0.10.0
libtpu: 0.0.40
codegen_flags: <defaults>
</compile_context>

<pallas_src>
import functools

import jax
import jax.numpy as jnp
from jax import lax
from jax.experimental import pallas as pl
from jax.experimental.pallas import tpu as pltpu

MIN_VARIANCE = 1e-3
ADF_EPS = 1e-5
LOSS_EPS = 1e-5


def _round_up(x, m):
    return ((x + m - 1) // m) * m


def _hetero_loss_kernel(mean_ref, var_ref, labels_ref, out_ref, *, n_valid, needs_mask):
    m = mean_ref[...].astype(jnp.float32)    # (C, T) logit means
    v = var_ref[...].astype(jnp.float32)     # (C, T) logit variances
    labels = labels_ref[...]                 # (1, T) int32

    # ---- adf.Softmax(dim=class, keep_variance_fn): log-normal approximation ----
    # exp(2*(m + v/2)) == exp(m + v/2)**2, so one exp serves both mean and variance.
    lg_mean = jnp.exp(m + 0.5 * v)                          # EUP exp #1
    # keep torch.exp(v) - 1 form to match the reference module exactly
    lg_var = (lg_mean * lg_mean) * (jnp.exp(v) - 1.0)       # EUP exp #2

    constant = jnp.sum(lg_mean, axis=0, keepdims=True) + ADF_EPS   # (1, T) sublane reduce
    inv_const = pl.reciprocal(constant, approx=False)   # small (1,T): exact recip is cheap
    out_mean = lg_mean * inv_const
    # keep_variance(min_variance) and the forward() eps folded into one constant add
    var_eps = lg_var * (inv_const * inv_const) + (MIN_VARIANCE + LOSS_EPS)

    # ---- heteroscedastic NLL ----
    # precision = 1/var_eps: EUP approx reciprocal + one Newton step recovers ~full
    # f32 accuracy while moving the bulk of the work off the saturated VALU slot.
    r0 = pl.reciprocal(var_eps, approx=True)                # EUP
    precision = r0 * (2.0 - var_eps * r0)                   # 3 VALU ops (Newton step)

    c, t = m.shape
    class_ids = lax.broadcasted_iota(jnp.int32, (c, t), 0)
    # one-hot target without materializing a separate (1 - mean) / (-mean) pair
    diff = jnp.where(class_ids == labels, 1.0, 0.0) - out_mean

    elems = precision * diff * diff + jnp.log(var_eps)   # 0.5 folded into wrapper scale

    # Class (sublane) reduce first; any ragged-tail masking happens on the cheap
    # (1, T) row, and is only emitted at all when N % tile_n != 0.
    row = jnp.sum(elems, axis=0, keepdims=True)          # (1, T)
    if needs_mask:
        i = pl.program_id(0)
        col_ids = lax.broadcasted_iota(jnp.int32, (1, t), 1) + i * t
        row = jnp.where(col_ids < n_valid, row, 0.0)

    tile_sum = jnp.sum(row, axis=1, keepdims=True)       # (1, 1)
    out_ref[...] = tile_sum.reshape(1, 1, 1)


def softmax_heteroscedastic_loss(mean, var, labels, *, tile_n=32768,
                                 vmem_limit_bytes=48 * 1024 * 1024):
    """mean, var: (N, C) float (f32 or bf16); labels: (N,) int -> scalar f32 loss."""
    n, c = mean.shape

    # Batch goes on the lane axis. Clamp the tile to the (128-rounded) batch size and
    # keep it a multiple of 128 so the lane dim of every block is layout-legal.
    tile_n = min(int(tile_n), _round_up(n, 128))
    tile_n = _round_up(tile_n, 128)
    num_tiles = pl.cdiv(n, tile_n)
    needs_mask = (n % tile_n) != 0

    # TODO(synk): fuse this (N,C)->(C,N) transpose into the upstream producer (or accept
    # class-major logits) to save one full HBM read+write pass of mean and var.
    mean_t = jnp.transpose(mean)                       # (C, N): class -> sublanes, batch -> lanes
    var_t = jnp.transpose(var)
    labels2d = labels.astype(jnp.int32).reshape(1, n)

    kernel = functools.partial(_hetero_loss_kernel, n_valid=n, needs_mask=needs_mask)

    partials = pl.pallas_call(
        kernel,
        out_shape=jax.ShapeDtypeStruct((num_tiles, 1, 1), jnp.float32),
        grid_spec=pltpu.PrefetchScalarGridSpec(
            num_scalar_prefetch=0,
            grid=(num_tiles,),
            in_specs=[
                pl.BlockSpec((c, tile_n), lambda i: (0, i)),
                pl.BlockSpec((c, tile_n), lambda i: (0, i)),
                pl.BlockSpec((1, tile_n), lambda i: (0, i)),
            ],
            # One private (1,1,1) partial-sum block per tile: no write races, so the
            # batch axis can be "parallel" (sharded across both TCs on v7x).
            out_specs=pl.BlockSpec((1, 1, 1), lambda i: (i, 0, 0)),
        ),
        compiler_params=pltpu.CompilerParams(
            dimension_semantics=("parallel",),
            vmem_limit_bytes=vmem_limit_bytes,
        ),
    )(mean_t, var_t, labels2d)

    # Final tiny reduction + the 0.5 / (N*C) mean scale in the wrapper.
    return jnp.sum(partials) * (0.5 / float(n * c))


def _reference_loss(mean, var, labels):
    # Pure-JAX mirror of the PyTorch module for a correctness check.
    m = mean.astype(jnp.float32)
    v = var.astype(jnp.float32)
    lgm = m + 0.5 * v
    lgv = 2.0 * lgm
    lgm = jnp.exp(lgm)
    lgv = jnp.exp(lgv) * (jnp.exp(v) - 1.0)
    const = jnp.sum(lgm, axis=1, keepdims=True) + ADF_EPS
    out_mean = lgm / const
    out_var = lgv / (const ** 2) + MIN_VARIANCE
    onehot = jax.nn.one_hot(labels, m.shape[1], dtype=jnp.float32)
    precision = 1.0 / (out_var + LOSS_EPS)
    return jnp.mean(0.5 * precision * (onehot - out_mean) ** 2
                    + 0.5 * jnp.log(out_var + LOSS_EPS))


if __name__ == "__main__":
    key = jax.random.PRNGKey(0)
    k1, k2, k3, k4, k5, k6 = jax.random.split(key, 6)

    # Case 1: CIFAR10-style batch (single ragged tile, N < 128).
    N, C = 8, 10
    mean_logits = jax.random.normal(k1, (N, C), dtype=jnp.float32)
    var_logits = jax.nn.softplus(jax.random.normal(k2, (N, C), dtype=jnp.float32))
    labels = jax.random.randint(k3, (N,), 0, C, dtype=jnp.int32)

    loss = jax.block_until_ready(
        softmax_heteroscedastic_loss(mean_logits, var_logits, labels))
    ref = _reference_loss(mean_logits, var_logits, labels)
    assert jnp.allclose(loss, ref, rtol=2e-5, atol=2e-5), (loss, ref)

    # Case 2: multi-tile parallel grid with a ragged tail (exercises per-tile
    # partials + edge-block masking without any wrapper padding).
    N2, C2 = 300, 10
    mean2 = jax.random.normal(k4, (N2, C2), dtype=jnp.float32)
    var2 = jax.nn.softplus(jax.random.normal(k5, (N2, C2), dtype=jnp.float32))
    labels2 = jax.random.randint(k6, (N2,), 0, C2, dtype=jnp.int32)

    loss2 = jax.block_until_ready(
        softmax_heteroscedastic_loss(mean2, var2, labels2, tile_n=128))
    ref2 = _reference_loss(mean2, var2, labels2)
    assert jnp.allclose(loss2, ref2, rtol=2e-5, atol=2e-5), (loss2, ref2)

    print("KERNEL_OK")
</pallas_src>

<mosaic_0001>
module attributes {stable_mosaic.version = 11 : i64} {
  func.func @_hetero_loss_kernel(%arg0: i32, %arg1: memref<10x128xf32, #tpu.memory_space<vmem>>, %arg2: memref<10x128xf32, #tpu.memory_space<vmem>>, %arg3: memref<1x128xi32, #tpu.memory_space<vmem>>, %arg4: memref<1x1x1xf32, #tpu.memory_space<vmem>>) attributes {dimension_semantics = [#tpu.dimension_semantics<parallel>], iteration_bounds = array<i64: 1>, scalar_prefetch = 0 : i64, scratch_operands = 0 : i64, tpu.core_type = #tpu.core_type<tc>, window_params = [{transform_indices = @transform_0, window_bounds = array<i64: 10, 128>}, {transform_indices = @transform_1, window_bounds = array<i64: 10, 128>}, {transform_indices = @transform_2, window_bounds = array<i64: 1, 128>}, {transform_indices = @transform_3, window_bounds = array<i64: 1, 1, 1>}]} {
    %c0 = arith.constant 0 : index
    %c0_0 = arith.constant 0 : index
    %0 = vector.load %arg1[%c0, %c0_0] : memref<10x128xf32, #tpu.memory_space<vmem>>, vector<10x128xf32>
    %c0_1 = arith.constant 0 : index
    %c0_2 = arith.constant 0 : index
    %1 = vector.load %arg2[%c0_1, %c0_2] : memref<10x128xf32, #tpu.memory_space<vmem>>, vector<10x128xf32>
    %c0_3 = arith.constant 0 : index
    %c0_4 = arith.constant 0 : index
    %2 = vector.load %arg3[%c0_3, %c0_4] : memref<1x128xi32, #tpu.memory_space<vmem>>, vector<1x128xi32>
    %cst = arith.constant 5.000000e-01 : f32
    %3 = vector.broadcast %cst : f32 to vector<10x128xf32>
    %4 = arith.mulf %3, %1 : vector<10x128xf32>
    %5 = arith.addf %0, %4 : vector<10x128xf32>
    %6 = math.exp %5 : vector<10x128xf32>
    %7 = arith.mulf %6, %6 : vector<10x128xf32>
    %8 = math.exp %1 : vector<10x128xf32>
    %cst_5 = arith.constant 1.000000e+00 : f32
    %9 = vector.broadcast %cst_5 : f32 to vector<10x128xf32>
    %10 = arith.subf %8, %9 : vector<10x128xf32>
    %11 = arith.mulf %7, %10 : vector<10x128xf32>
    %cst_6 = arith.constant dense<0.000000e+00> : vector<128xf32>
    %12 = vector.multi_reduction <add>, %6, %cst_6 [0] : vector<10x128xf32> to vector<128xf32>
    %13 = vector.shape_cast %12 : vector<128xf32> to vector<1x128xf32>
    %cst_7 = arith.constant 9.99999974E-6 : f32
    %14 = vector.broadcast %cst_7 : f32 to vector<1x128xf32>
    %15 = arith.addf %13, %14 : vector<1x128xf32>
    %16 = tpu.reciprocal %15 : vector<1x128xf32> -> vector<1x128xf32>
    %17 = vector.broadcast %16 : vector<1x128xf32> to vector<10x128xf32>
    %18 = arith.mulf %6, %17 : vector<10x128xf32>
    %19 = arith.mulf %16, %16 : vector<1x128xf32>
    %20 = vector.broadcast %19 : vector<1x128xf32> to vector<10x128xf32>
    %21 = arith.mulf %11, %20 : vector<10x128xf32>
    %cst_8 = arith.constant 1.010000e-03 : f32
    %22 = vector.broadcast %cst_8 : f32 to vector<10x128xf32>
    %23 = arith.addf %21, %22 : vector<10x128xf32>
    %24 = tpu.reciprocal %23 {approx = true} : vector<10x128xf32> -> vector<10x128xf32>
    %25 = arith.mulf %23, %24 : vector<10x128xf32>
    %cst_9 = arith.constant 2.000000e+00 : f32
    %26 = vector.broadcast %cst_9 : f32 to vector<10x128xf32>
    %27 = arith.subf %26, %25 : vector<10x128xf32>
    %28 = arith.mulf %24, %27 : vector<10x128xf32>
    %29 = tpu.iota {dimensions = array<i32: 0>} : vector<10x128xi32>
    %30 = vector.broadcast %2 : vector<1x128xi32> to vector<10x128xi32>
    %31 = arith.cmpi eq, %29, %30 : vector<10x128xi32>
    %cst_10 = arith.constant 1.000000e+00 : f32
    %cst_11 = arith.constant 0.000000e+00 : f32
    %32 = vector.broadcast %cst_10 : f32 to vector<10x128xf32>
    %33 = vector.broadcast %cst_11 : f32 to vector<10x128xf32>
    %34 = arith.select %31, %32, %33 : vector<10x128xi1>, vector<10x128xf32>
    %35 = arith.subf %34, %18 : vector<10x128xf32>
    %36 = arith.mulf %28, %35 : vector<10x128xf32>
    %37 = arith.mulf %36, %35 : vector<10x128xf32>
    %38 = math.log %23 : vector<10x128xf32>
    %39 = arith.addf %37, %38 : vector<10x128xf32>
    %cst_12 = arith.constant dense<0.000000e+00> : vector<128xf32>
    %40 = vector.multi_reduction <add>, %39, %cst_12 [0] : vector<10x128xf32> to vector<128xf32>
    %41 = vector.shape_cast %40 : vector<128xf32> to vector<1x128xf32>
    %42 = tpu.iota {dimensions = array<i32: 1>} : vector<1x128xi32>
    %c128_i32 = arith.constant 128 : i32
    %43 = arith.muli %arg0, %c128_i32 : i32
    %44 = vector.broadcast %43 : i32 to vector<1x128xi32>
    %45 = arith.addi %42, %44 : vector<1x128xi32>
    %c8_i32 = arith.constant 8 : i32
    %46 = vector.broadcast %c8_i32 : i32 to vector<1x128xi32>
    %47 = arith.cmpi slt, %45, %46 : vector<1x128xi32>
    %cst_13 = arith.constant 0.000000e+00 : f32
    %48 = vector.broadcast %cst_13 : f32 to vector<1x128xf32>
    %49 = arith.select %47, %41, %48 : vector<1x128xi1>, vector<1x128xf32>
    %cst_14 = arith.constant dense<0.000000e+00> : vector<1xf32>
    %50 = vector.multi_reduction <add>, %49, %cst_14 [1] : vector<1x128xf32> to vector<1xf32>
    %51 = vector.shape_cast %50 : vector<1xf32> to vector<1x1xf32>
    %52 = vector.shape_cast %51 : vector<1x1xf32> to vector<1x1x1xf32>
    %c0_15 = arith.constant 0 : index
    %c0_16 = arith.constant 0 : index
    %c0_17 = arith.constant 0 : index
    %53 = vector.load %arg4[%c0_15, %c0_16, %c0_17] : memref<1x1x1xf32, #tpu.memory_space<vmem>>, vector<1x1x1xf32>
    tpu.vector_store %arg4[%c0_15, %c0_16, %c0_17], %52 {strides = array<i32>} : memref<1x1x1xf32, #tpu.memory_space<vmem>>, vector<1x1x1xf32>,
    return
  }
  func.func @transform_0(%arg0: i32) -> (i32, i32) {
    %c0_i32 = arith.constant 0 : i32
    %c0_i32_0 = arith.constant 0 : i32
    return %c0_i32, %arg0 : i32, i32
  }
  func.func @transform_1(%arg0: i32) -> (i32, i32) {
    %c0_i32 = arith.constant 0 : i32
    %c0_i32_0 = arith.constant 0 : i32
    return %c0_i32, %arg0 : i32, i32
  }
  func.func @transform_2(%arg0: i32) -> (i32, i32) {
    %c0_i32 = arith.constant 0 : i32
    %c0_i32_0 = arith.constant 0 : i32
    return %c0_i32, %arg0 : i32, i32
  }
  func.func @transform_3(%arg0: i32) -> (i32, i32, i32) {
    %c0_i32 = arith.constant 0 : i32
    %c0_i32_0 = arith.constant 0 : i32
    %c0_i32_1 = arith.constant 0 : i32
    return %arg0, %c0_i32, %c0_i32_0 : i32, i32, i32
  }
}

</mosaic_0001>

<llo_original>
// kernel: tpu_custom_call.1
$region0: #{tpu_custom_call.1}
  #allocation0 [shape = 'u32[]', space=smem, size = 0x4, offset = 0x4, fixed_abs, tag = 'smem constant byte address 0x4 - core index']
  #allocation1 [shape = 'u32[144,128]{1,0:T(1,128)}', space=vmem, size = 0x12000, scoped, tag = 'internal scratch']
  %s0 = inlined_call_operand.vmem [shape: f32[10,8], index: 0, kind: input, shape index: {}]
  %s1 = inlined_call_operand.vmem [shape: f32[10,8], index: 1, kind: input, shape index: {}]
  %s2 = inlined_call_operand.vmem [shape: s32[1,8], index: 2, kind: input, shape index: {}]
  %s3 = inlined_call_operand.hbm [shape: f32[1,1,1], index: 3, kind: output, shape index: {}]
  %s4 = sld [smem:[#allocation0]]
  $region22: #{tpu_custom_call.1} parent=0
    _
  %s6 = ssub.s32 1, %s4
  %s7 = scalar_select 0, %s6, %s4
  $region1: #{tpu_custom_call.1} parent=0
    #allocation2 [shape = 'u8[512]{0}', space=vmem, size = 0x400, scoped, tag = 'output window, operand 0, single buffered']
    #allocation3 [shape = 's32[1]{0}', space=sflag, size = 0x4, scoped, tag = 'scoped memory for tpu_custom_call.1']
    %8 = vsyncpa [#allocation3], 0
    // Predicated region
    $region2: #{tpu_custom_call.1} parent=1 // pred_check
      _
    $region3: #{tpu_custom_call.1} parent=1 // pred_check_branch
      %10 = sbr.rel (0) target = $region5
    $region4: #{tpu_custom_call.1} parent=1 // pred_region
      _
    $region5: #{tpu_custom_call.1} parent=1 // pred_fallthru
      _
    // Predicated region
    $region6: #{tpu_custom_call.1} parent=1 // pred_check
      _
    $region7: #{tpu_custom_call.1} parent=1 // pred_check_branch
      %12 = sbr.rel (0) target = $region9
    $region8: #{tpu_custom_call.1} parent=1 // pred_region
      _
    $region9: #{tpu_custom_call.1} parent=1 // pred_fallthru
      _
    // Predicated region
    $region10: #{tpu_custom_call.1} parent=1 // pred_check
      _
    $region11: #{tpu_custom_call.1} parent=1 // pred_check_branch
      %14 = sbr.rel (0) target = $region13
    $region12: #{tpu_custom_call.1} parent=1 // pred_region
      _
    $region13: #{tpu_custom_call.1} parent=1 // pred_fallthru
      _
    %v15 = vld [vmem:[%s0] sm:$0xff]
    %v16 = vld [vmem:[%s0 + $0x8] sm:$0x3]
    %v17 = vld [vmem:[%s1] sm:$0xff]
    %v18 = vld [vmem:[%s1 + $0x8] sm:$0x3]
    %v19 = vld [vmem:[%s2] sm:$0x1]
    %v20 = vmul.f32 %v17, 0.5
    %v21 = vmul.f32 %v18, 0.5
    %v22 = vadd.f32 %v15, %v20
    %v23 = vadd.f32 %v16, %v21
    %v24 = vmul.f32 %v22, 1.442695
    %v25 = vpow.pop %v24
    %v26 = vmul.f32 %v23, 1.442695
    %v27 = vpow.pop %v26
    %v28 = vmul.f32 %v25, %v25
    %v29 = vmul.f32 %v27, %v27
    %v30 = vmul.f32 %v17, 1.442695
    %v31 = vpow.pop %v30
    %v32 = vmul.f32 %v18, 1.442695
    %v33 = vpow.pop %v32
    %v34 = vsub.f32 %v31, 1.0
    %v35 = vsub.f32 %v33, 1.0
    %v36 = vmul.f32 %v28, %v34
    %v37 = vmul.f32 %v29, %v35
    %vm38 = vcmask 1041408
    %v39 = vsel %vm38, %v27, 0.0
    %v40 = vadd.f32 %v25, %v39
    %v41 = vrot.slane %v40, 4
    %v42 = vadd.f32 %v40, %v41
    %v43 = vrot.slane %v42, 2
    %v44 = vadd.f32 %v42, %v43
    %v45 = vrot.slane %v44, 1
    %v46 = vadd.f32 %v44, %v45
    %v47 = vadd.f32 %v46, 1e-05
    %v48 = vrcp.pop %v47
    %v49 = vmul.f32 %v25, %v48
    %v50 = vmul.f32 %v27, %v48
    %v51 = vmul.f32 %v48, %v48
    %v52 = vmul.f32 %v36, %v51
    %v53 = vmul.f32 %v37, %v51
    %v54 = vadd.f32 %v52, 0.00101
    %v55 = vadd.f32 %v53, 0.00101
    %v56 = vrcp.pop %v54
    %v57 = vrcp.pop %v55
    %v58 = vmul.f32 %v54, %v56
    %v59 = vmul.f32 %v55, %v57
    %v60 = vsub.f32 2.0, %v58
    %v61 = vsub.f32 2.0, %v59
    %v62 = vmul.f32 %v56, %v60
    %v63 = vmul.f32 %v57, %v61
    %v64 = vlaneseq
    %v65 = vshrl.u32 %v64, 7
    %v66 = vadd.s32 %v65, 8
    %v67 = vlaneseq
    %v68 = vshrl.u32 %v67, 7
    %v69 = vsub.s32 0, %v68
    %v70 = vrot.slane %v19, %v69
    %vm71 = vcmp.eq.s32.totalorder %v65, %v70
    %vm72 = vcmp.eq.s32.totalorder %v66, %v70
    %v73 = vsel %vm71, 1.0, 0.0
    %v74 = vsel %vm72, 1.0, 0.0
    %v75 = vsub.f32 %v73, %v49
    %v76 = vsub.f32 %v74, %v50
    %v77 = vmul.f32 %v62, %v75
    %v78 = vmul.f32 %v63, %v76
    %v79 = vmul.f32 %v77, %v75
    %v80 = vmul.f32 %v78, %v76
    %v81 = vlog2.pop %v54
    %v82 = vmul.f32 %v81, 0.6931472
    %v83 = vlog2.pop %v55
    %v84 = vmul.f32 %v83, 0.6931472
    %v85 = vadd.f32 %v79, %v82
    %v86 = vadd.f32 %v80, %v84
    %v87 = vsel %vm38, %v86, 0.0
    %v88 = vadd.f32 %v85, %v87
    %v89 = vrot.slane %v88, 4
    %v90 = vadd.f32 %v88, %v89
    %v91 = vrot.slane %v90, 2
    %v92 = vadd.f32 %v90, %v91
    %v93 = vrot.slane %v92, 1
    %v94 = vadd.f32 %v92, %v93
    %v95 = vlaneseq
    %v96 = vand.u32 %v95, 127
    %s97 = smul.u32 0, 128
    %v98 = vstv %s97
    %v99 = vadd.s32 %v96, %v98
    %vm100 = vcmp.lt.s32.totalorder %v99, 8
    %v101 = vsel %vm100, %v94, 0.0
    %102 = vadd.xlane.f32.xlu0 %v101
    %v103 = vpop.xlane.xlu0 %102
    %vm104 = vcmask 0
    %105 = vst.msk [vmem:[#allocation2] sm:$0x1] %vm104, %v103
    // Predicated region
    $region14: #{tpu_custom_call.1} parent=1 // pred_check
      _
    $region15: #{tpu_custom_call.1} parent=1 // pred_check_branch
      %107 = sbr.rel (0) target = $region17
    $region16: #{tpu_custom_call.1} parent=1 // pred_region
      %s109 = ssub.s32 16, 16
      %110 = vsyncadd [#allocation3], %s109
      %s112 = sshll.u32 [#allocation2], 4
      %s113 = int_to_ptr.vmem [resolvable:$true] %s112
      %115 = dma.vmem_to_hbm [thread:$0]  %s113, 16, %s3, [#allocation3]
    $region17: #{tpu_custom_call.1} parent=1 // pred_fallthru
      _
    // Predicated region
    $region18: #{tpu_custom_call.1} parent=1 // pred_check
      _
    $region19: #{tpu_custom_call.1} parent=1 // pred_check_branch
      %117 = sbr.rel (0) target = $region21
    $region20: #{tpu_custom_call.1} parent=1 // pred_region
      %118 = dma.done [#allocation3], 16
    $region21: #{tpu_custom_call.1} parent=1 // pred_fallthru
      _
    %119 = vsyncpa [#allocation3], 1

</llo_original>
